<compile_context>
chip_gen: v5e
topology: v5e:2x2
jax: 0.10.0
libtpu: 0.0.40
codegen_flags: <defaults>
</compile_context>

<pallas_src>
import functools

import jax
import jax.numpy as jnp
from jax import lax
from jax.experimental import pallas as pl
from jax.experimental.pallas import tpu as pltpu


_EPS = 1e-8


def _vmem_budget_bytes():
    """Per-generation VMEM sizing: returns (working-set budget, scoped limit)."""
    cap = None
    try:
        info = pltpu.get_tpu_info()
        cap = int(getattr(info, "vmem_capacity_bytes"))
    except Exception:
        cap = None
    if not cap or cap < (16 << 20):
        cap = 64 << 20                      # conservative fallback (v7x-sized VMEM)
    budget = (cap * 5) // 8                 # ~80 MiB on 128 MiB parts, ~40 MiB on v7x
    limit = (cap * 4) // 5                  # ~102 MiB / ~51 MiB scoped vmem limit
    return int(budget), int(limit)


# ---------------------------------------------------------------------------
# Path 1: whole (N, K) slab of one batch element per grid step.
# ---------------------------------------------------------------------------
def _gln_slab_kernel(y_ref, gamma_ref, beta_ref, o_ref):
    # y_ref: (1, N, K); gamma_ref / beta_ref: (1, N, 1) (sublane-major params,
    # so the per-channel scale/shift needs only a lane broadcast, no relayout).
    y32 = y_ref[...].astype(jnp.float32)
    n, k = y32.shape[1], y32.shape[2]
    inv_count = 1.0 / float(n * k)

    # Single pass over the resident slab: sum and sum-of-squares (f32 stats).
    # NOTE: var = E[x^2] - mean^2 loses precision if |mean| >> std; acceptable
    # for activation statistics (documented per review).
    s = jnp.sum(y32)
    s2 = jnp.sum(y32 * y32)
    mean = s * inv_count
    var = s2 * inv_count - mean * mean
    inv_std = lax.rsqrt(var + _EPS)

    g = gamma_ref[...].astype(jnp.float32)              # (1, N, 1)
    b = beta_ref[...].astype(jnp.float32)
    scale = (g * inv_std).astype(o_ref.dtype)           # (1, N, 1)
    shift = (b - mean * g * inv_std).astype(o_ref.dtype)

    # Re-read y_ref for the FMA so the f32 slab temp is consumed by the
    # reductions and is not kept live through the normalize.  The normalize is
    # a native-dtype FMA (bf16 FMA on v6e/v7x for bf16 inputs; f32 unchanged).
    o_ref[...] = (y_ref[...] * scale + shift).astype(o_ref.dtype)


def _gln_slab(y, gamma3, beta3, *, vmem_limit):
    M, N, K = y.shape
    return pl.pallas_call(
        _gln_slab_kernel,
        out_shape=jax.ShapeDtypeStruct((M, N, K), y.dtype),
        grid_spec=pltpu.PrefetchScalarGridSpec(
            num_scalar_prefetch=0,
            grid=(M,),
            in_specs=[
                pl.BlockSpec((1, N, K), lambda m: (m, 0, 0)),
                pl.BlockSpec((1, N, 1), lambda m: (0, 0, 0)),
                pl.BlockSpec((1, N, 1), lambda m: (0, 0, 0)),
            ],
            out_specs=pl.BlockSpec((1, N, K), lambda m: (m, 0, 0)),
        ),
        compiler_params=pltpu.CompilerParams(
            dimension_semantics=("parallel",),
            vmem_limit_bytes=int(vmem_limit),
        ),
    )(y, gamma3, beta3)


# ---------------------------------------------------------------------------
# Path 2: K-tiled, two pallas_calls (stats, then megacore-parallel normalize).
# ---------------------------------------------------------------------------
def _gln_stats_kernel(y_ref, gamma_ref, beta_ref, scale_ref, shift_ref,
                      sum_vec, sq_vec, *, inv_count):
    kt = pl.program_id(1)

    @pl.when(kt == 0)
    def _():
        sum_vec[...] = jnp.zeros_like(sum_vec)
        sq_vec[...] = jnp.zeros_like(sq_vec)

    # Per-tile: sublane-direction reduce only (keep lanes) into a lane-wide
    # vector accumulator; the single cross-lane reduce happens in the finalize.
    y = y_ref[...].astype(jnp.float32)                   # (1, N, TK)
    sum_vec[...] += jnp.sum(y, axis=1)                   # (1, TK)
    sq_vec[...] += jnp.sum(y * y, axis=1)

    @pl.when(kt == pl.num_programs(1) - 1)
    def _():
        s = jnp.sum(sum_vec[...])
        s2 = jnp.sum(sq_vec[...])
        mean = s * inv_count
        var = s2 * inv_count - mean * mean               # documented E[x^2]-m^2
        inv_std = lax.rsqrt(var + _EPS)
        g = gamma_ref[...].astype(jnp.float32)           # (1, N, 1)
        b = beta_ref[...].astype(jnp.float32)
        scale = g * inv_std                              # (1, N, 1), sublane-major
        scale_ref[...] = scale
        shift_ref[...] = b - mean * scale


def _gln_norm_kernel(y_ref, scale_ref, shift_ref, o_ref):
    # scale/shift are (1, N, 1): lane broadcast only, no lane->sublane relayout.
    # Normalize runs as a native-dtype FMA (bf16 on v6e/v7x for bf16 inputs).
    scale = scale_ref[...].astype(o_ref.dtype)
    shift = shift_ref[...].astype(o_ref.dtype)
    o_ref[...] = (y_ref[...] * scale + shift).astype(o_ref.dtype)


def _gln_tiled(y, gamma3, beta3, *, k_tile, true_count, vmem_limit):
    M, N, Kp = y.shape
    assert Kp % k_tile == 0, "k_tile must divide (padded) K"
    nkt = Kp // k_tile

    stats_kernel = functools.partial(
        _gln_stats_kernel, inv_count=1.0 / float(true_count))
    scale, shift = pl.pallas_call(
        stats_kernel,
        out_shape=(jax.ShapeDtypeStruct((M, N, 1), jnp.float32),
                   jax.ShapeDtypeStruct((M, N, 1), jnp.float32)),
        grid_spec=pltpu.PrefetchScalarGridSpec(
            num_scalar_prefetch=0,
            grid=(M, nkt),
            in_specs=[
                pl.BlockSpec((1, N, k_tile), lambda m, k: (m, 0, k)),
                pl.BlockSpec((1, N, 1), lambda m, k: (0, 0, 0)),
                pl.BlockSpec((1, N, 1), lambda m, k: (0, 0, 0)),
            ],
            out_specs=[
                pl.BlockSpec((1, N, 1), lambda m, k: (m, 0, 0)),
                pl.BlockSpec((1, N, 1), lambda m, k: (m, 0, 0)),
            ],
            scratch_shapes=[
                pltpu.VMEM((1, k_tile), jnp.float32),    # running per-lane sum
                pltpu.VMEM((1, k_tile), jnp.float32),    # running per-lane sum sq
            ],
        ),
        compiler_params=pltpu.CompilerParams(
            dimension_semantics=("parallel", "arbitrary"),
            vmem_limit_bytes=int(vmem_limit),
        ),
    )(y, gamma3, beta3)

    # Normalize sweep: both grid axes parallel so both v7x TensorCores share
    # the K tiles even when M is 1 or odd.
    return pl.pallas_call(
        _gln_norm_kernel,
        out_shape=jax.ShapeDtypeStruct((M, N, Kp), y.dtype),
        grid_spec=pltpu.PrefetchScalarGridSpec(
            num_scalar_prefetch=0,
            grid=(M, nkt),
            in_specs=[
                pl.BlockSpec((1, N, k_tile), lambda m, k: (m, 0, k)),
                pl.BlockSpec((1, N, 1), lambda m, k: (m, 0, 0)),
                pl.BlockSpec((1, N, 1), lambda m, k: (m, 0, 0)),
            ],
            out_specs=pl.BlockSpec((1, N, k_tile), lambda m, k: (m, 0, k)),
        ),
        compiler_params=pltpu.CompilerParams(
            dimension_semantics=("parallel", "parallel"),
            vmem_limit_bytes=int(vmem_limit),
        ),
    )(y, scale, shift)


# ---------------------------------------------------------------------------
# Public wrapper: picks a path based on dtype-aware slab size vs. VMEM budget.
# ---------------------------------------------------------------------------
def global_layer_norm(y, gamma, beta, *, force_tiled=False, k_tile=None):
    """gLN forward. y: [M, N, K]; gamma, beta: [1, N, 1] -> [M, N, K]."""
    M, N, K = y.shape
    gamma3 = jnp.reshape(gamma, (1, N, 1)).astype(jnp.float32)
    beta3 = jnp.reshape(beta, (1, N, 1)).astype(jnp.float32)

    budget, limit = _vmem_budget_bytes()
    itemsize = jnp.dtype(y.dtype).itemsize

    # Dtype-aware slab residency: double-buffered input + output in the native
    # dtype plus ~2 f32-slab-sized temporaries during the reductions.
    slab_need = N * K * (4 * itemsize + 2 * 4)
    if slab_need <= budget and not force_tiled:
        return _gln_slab(y, gamma3, beta3, vmem_limit=limit)

    # Tiled path: pad K to a lane-dense multiple of 128 (zero padding adds 0 to
    # sum and sum-of-squares; we divide by the true N*K) so every store is an
    # unmasked, lane-dense vst.
    K_pad = K
    y_t = y
    if K % 128 != 0:
        K_pad = ((K + 127) // 128) * 128
        y_t = jnp.pad(y, ((0, 0), (0, 0), (0, K_pad - K)))

    if k_tile is None:
        # Prefer large lane-dense tiles (>=512 when K allows); per-step VMEM is
        # dtype-aware and must fit the per-generation budget.
        k_tile = 128
        while (K_pad % (k_tile * 2) == 0 and
               N * (k_tile * 2) * (4 * itemsize + 2 * 4) <= budget):
            k_tile *= 2
    assert K_pad % k_tile == 0, "k_tile must divide the (padded) length"

    # TODO(synk): for channel-light shapes (N < 8), present the slab as a 2-D
    # lane-dense view (fold K into sublanes) to avoid (N/8)-utilized vregs.
    out = _gln_tiled(y_t, gamma3, beta3, k_tile=k_tile,
                     true_count=N * K, vmem_limit=limit)
    if K_pad != K:
        out = out[:, :, :K]
    return out


# ---------------------------------------------------------------------------
# Reference + self-test
# ---------------------------------------------------------------------------
def reference_gln(y, gamma, beta):
    mean = y.mean(axis=(1, 2), keepdims=True)
    var = ((y - mean) ** 2).mean(axis=(1, 2), keepdims=True)
    return gamma * (y - mean) / jnp.sqrt(var + 1e-8) + beta


if __name__ == "__main__":
    key = jax.random.PRNGKey(0)
    k1, k2, k3 = jax.random.split(key, 3)

    # Primary small shape [M, N, K] = (batch, channel_size, length); params as
    # in reset_parameters(): gamma=1, beta=0.  Exercises the slab path.
    M, N, K = 2, 4, 16
    y = jax.random.normal(k1, (M, N, K), dtype=jnp.float32)
    gamma = jnp.ones((1, N, 1), dtype=jnp.float32)
    beta = jnp.zeros((1, N, 1), dtype=jnp.float32)
    out = jax.block_until_ready(global_layer_norm(y, gamma, beta))
    ref = reference_gln(y, gamma, beta)
    assert jnp.allclose(out, ref, atol=1e-5, rtol=1e-5), "slab path mismatch vs reference"

    # Two-call tiled path (stats + parallel normalize) with k_tile >= 512.
    M2, N2, K2 = 2, 8, 1024
    y2 = jax.random.normal(k2, (M2, N2, K2), dtype=jnp.float32)
    g2 = jnp.ones((1, N2, 1), dtype=jnp.float32)
    b2 = jnp.zeros((1, N2, 1), dtype=jnp.float32)
    out2 = jax.block_until_ready(
        global_layer_norm(y2, g2, b2, force_tiled=True, k_tile=512))
    ref2 = reference_gln(y2, g2, b2)
    assert jnp.allclose(out2, ref2, atol=1e-5, rtol=1e-5), "tiled path mismatch vs reference"

    # Non-128-divisible length exercises the lane-dense K-padding path.
    M3, N3, K3 = 2, 8, 200
    y3 = jax.random.normal(k3, (M3, N3, K3), dtype=jnp.float32)
    g3 = jnp.ones((1, N3, 1), dtype=jnp.float32)
    b3 = jnp.zeros((1, N3, 1), dtype=jnp.float32)
    out3 = jax.block_until_ready(global_layer_norm(y3, g3, b3, force_tiled=True))
    ref3 = reference_gln(y3, g3, b3)
    assert jnp.allclose(out3, ref3, atol=1e-5, rtol=1e-5), "padded tiled path mismatch"

    print("KERNEL_OK")
</pallas_src>

<mosaic_0001>
module attributes {stable_mosaic.version = 11 : i64} {
  func.func @_gln_slab_kernel(%arg0: i32, %arg1: memref<1x4x16xf32, #tpu.memory_space<vmem>>, %arg2: memref<1x4x1xf32, #tpu.memory_space<vmem>>, %arg3: memref<1x4x1xf32, #tpu.memory_space<vmem>>, %arg4: memref<1x4x16xf32, #tpu.memory_space<vmem>>) attributes {dimension_semantics = [#tpu.dimension_semantics<parallel>], iteration_bounds = array<i64: 2>, scalar_prefetch = 0 : i64, scratch_operands = 0 : i64, tpu.core_type = #tpu.core_type<tc>, window_params = [{transform_indices = @transform_0, window_bounds = array<i64: 1, 4, 16>}, {pipeline_mode = #tpu.pipeline_mode<synchronous>, transform_indices = @transform_1, window_bounds = array<i64: 1, 4, 1>}, {pipeline_mode = #tpu.pipeline_mode<synchronous>, transform_indices = @transform_2, window_bounds = array<i64: 1, 4, 1>}, {transform_indices = @transform_3, window_bounds = array<i64: 1, 4, 16>}]} {
    %c0 = arith.constant 0 : index
    %c0_0 = arith.constant 0 : index
    %c0_1 = arith.constant 0 : index
    %0 = vector.load %arg1[%c0, %c0_0, %c0_1] : memref<1x4x16xf32, #tpu.memory_space<vmem>>, vector<1x4x16xf32>
    %1 = vector.shape_cast %0 : vector<1x4x16xf32> to vector<1x1x4x16xf32>
    %cst = arith.constant dense<0.000000e+00> : vector<1xf32>
    %2 = vector.multi_reduction <add>, %1, %cst [1, 2, 3] : vector<1x1x4x16xf32> to vector<1xf32>
    %3 = vector.shape_cast %2 : vector<1xf32> to vector<1x1x1x1xf32>
    %4 = vector.extract %3[0, 0, 0, 0] : f32 from vector<1x1x1x1xf32>
    %5 = arith.mulf %0, %0 : vector<1x4x16xf32>
    %6 = vector.shape_cast %5 : vector<1x4x16xf32> to vector<1x1x4x16xf32>
    %cst_2 = arith.constant dense<0.000000e+00> : vector<1xf32>
    %7 = vector.multi_reduction <add>, %6, %cst_2 [1, 2, 3] : vector<1x1x4x16xf32> to vector<1xf32>
    %8 = vector.shape_cast %7 : vector<1xf32> to vector<1x1x1x1xf32>
    %9 = vector.extract %8[0, 0, 0, 0] : f32 from vector<1x1x1x1xf32>
    %cst_3 = arith.constant 1.562500e-02 : f32
    %10 = arith.mulf %4, %cst_3 : f32
    %cst_4 = arith.constant 1.562500e-02 : f32
    %11 = arith.mulf %9, %cst_4 : f32
    %12 = arith.mulf %10, %10 : f32
    %13 = arith.subf %11, %12 : f32
    %cst_5 = arith.constant 9.99999993E-9 : f32
    %14 = arith.addf %13, %cst_5 : f32
    %15 = math.rsqrt %14 : f32
    %c0_6 = arith.constant 0 : index
    %c0_7 = arith.constant 0 : index
    %c0_8 = arith.constant 0 : index
    %16 = vector.load %arg2[%c0_6, %c0_7, %c0_8] : memref<1x4x1xf32, #tpu.memory_space<vmem>>, vector<1x4x1xf32>
    %c0_9 = arith.constant 0 : index
    %c0_10 = arith.constant 0 : index
    %c0_11 = arith.constant 0 : index
    %17 = vector.load %arg3[%c0_9, %c0_10, %c0_11] : memref<1x4x1xf32, #tpu.memory_space<vmem>>, vector<1x4x1xf32>
    %18 = vector.broadcast %15 : f32 to vector<1x4x1xf32>
    %19 = arith.mulf %16, %18 : vector<1x4x1xf32>
    %20 = vector.broadcast %10 : f32 to vector<1x4x1xf32>
    %21 = arith.mulf %20, %16 : vector<1x4x1xf32>
    %22 = vector.broadcast %15 : f32 to vector<1x4x1xf32>
    %23 = arith.mulf %21, %22 : vector<1x4x1xf32>
    %24 = arith.subf %17, %23 : vector<1x4x1xf32>
    %c0_12 = arith.constant 0 : index
    %c0_13 = arith.constant 0 : index
    %c0_14 = arith.constant 0 : index
    %25 = vector.load %arg1[%c0_12, %c0_13, %c0_14] : memref<1x4x16xf32, #tpu.memory_space<vmem>>, vector<1x4x16xf32>
    %26 = vector.broadcast %19 : vector<1x4x1xf32> to vector<1x4x16xf32>
    %27 = arith.mulf %25, %26 : vector<1x4x16xf32>
    %28 = vector.broadcast %24 : vector<1x4x1xf32> to vector<1x4x16xf32>
    %29 = arith.addf %27, %28 : vector<1x4x16xf32>
    %c0_15 = arith.constant 0 : index
    %c0_16 = arith.constant 0 : index
    %c0_17 = arith.constant 0 : index
    %30 = vector.load %arg4[%c0_15, %c0_16, %c0_17] : memref<1x4x16xf32, #tpu.memory_space<vmem>>, vector<1x4x16xf32>
    tpu.vector_store %arg4[%c0_15, %c0_16, %c0_17], %29 {strides = array<i32>} : memref<1x4x16xf32, #tpu.memory_space<vmem>>, vector<1x4x16xf32>,
    return
  }
  func.func @transform_0(%arg0: i32) -> (i32, i32, i32) {
    %c0_i32 = arith.constant 0 : i32
    %c0_i32_0 = arith.constant 0 : i32
    %c0_i32_1 = arith.constant 0 : i32
    return %arg0, %c0_i32, %c0_i32_0 : i32, i32, i32
  }
  func.func @transform_1(%arg0: i32) -> (i32, i32, i32) {
    %c0_i32 = arith.constant 0 : i32
    %c0_i32_0 = arith.constant 0 : i32
    %c0_i32_1 = arith.constant 0 : i32
    %c0_i32_2 = arith.constant 0 : i32
    return %c0_i32, %c0_i32_0, %c0_i32_1 : i32, i32, i32
  }
  func.func @transform_2(%arg0: i32) -> (i32, i32, i32) {
    %c0_i32 = arith.constant 0 : i32
    %c0_i32_0 = arith.constant 0 : i32
    %c0_i32_1 = arith.constant 0 : i32
    %c0_i32_2 = arith.constant 0 : i32
    return %c0_i32, %c0_i32_0, %c0_i32_1 : i32, i32, i32
  }
  func.func @transform_3(%arg0: i32) -> (i32, i32, i32) {
    %c0_i32 = arith.constant 0 : i32
    %c0_i32_0 = arith.constant 0 : i32
    %c0_i32_1 = arith.constant 0 : i32
    return %arg0, %c0_i32, %c0_i32_0 : i32, i32, i32
  }
}

</mosaic_0001>

<llo_original>
// kernel: tpu_custom_call.1
$region0: #{tpu_custom_call.1}
  #allocation0 [shape = 'u32[]', space=smem, size = 0x4, offset = 0x4, fixed_abs, tag = 'smem constant byte address 0x4 - core index']
  #allocation1 [shape = 'u32[72,128]{1,0:T(1,128)}', space=vmem, size = 0x9000, scoped, tag = 'internal scratch']
  %s0 = inlined_call_operand.vmem [shape: f32[2,4,16], index: 0, kind: input, shape index: {}]
  %s1 = inlined_call_operand.vmem [shape: f32[1,4,1], index: 1, kind: input, shape index: {}]
  %s2 = inlined_call_operand.vmem [shape: f32[1,4,1], index: 2, kind: input, shape index: {}]
  %s3 = inlined_call_operand.hbm [shape: f32[2,4,16], index: 3, kind: output, shape index: {}]
  %s4 = sld [smem:[#allocation0]]
  $region45: #{tpu_custom_call.1} parent=0
    _
  %s6 = ssub.s32 1, %s4
  %s7 = scalar_select 0, %s6, %s4
  $region1: #{tpu_custom_call.1} parent=0
    #allocation2 [shape = 'u8[4096]{0}', space=vmem, size = 0x1000, scoped, tag = 'output window, operand 0']
    #allocation3 [shape = 's32[2]{0}', space=sflag, size = 0x8, scoped, tag = 'scoped memory for tpu_custom_call.1']
    %8 = vsyncpa [#allocation3], 0
    %s9 = scalar_lea.sflag [#allocation3], 1
    %10 = vsyncpa %s9, 0
    loop: start=0, step=1, limit=4
    $region2: #{tpu_custom_call.1} parent=1 // loop_pre_header
      _
    $region3: #{tpu_custom_call.1} parent=1 // loop_header
      %s12 = sphi 0, %s16
      %p13 = scmp.ge.s32.totalorder %s12, 4
      %s22 = sphi 0, %s24
      %s25 = sphi 0, %s22
      %s26 = sphi 0, %s25
      %s42 = sphi 0, %s26
      %s46 = sphi 0, %s46
      %s48 = sphi 0, %s46
      %s49 = sphi 0, %s48
      %s63 = sphi 0, %s49
      %s67 = sphi 0, %s67
      %s69 = sphi 0, %s67
      %s70 = sphi 0, %s69
      %s84 = sphi 0, %s70
      %s90 = sphi 0, %s92
      %s93 = sphi 0, %s90
      %s94 = sphi 0, %s93
      %s110 = sphi 0, %s94
    $region4: #{tpu_custom_call.1} parent=1 // loop_header_branch
      %15 = sbr.rel (%p13) target = $region8
    $region5: #{tpu_custom_call.1} parent=1 // loop_body
      %s17 = ssub.s32 %s12, 1
      %s18 = ssub.s32 %s12, 2
      %s19 = sadd.s32 %s12, 1
      %s20 = ssub.s32 %s12, %s19
      %p21 = scmp.eq.s32.totalorder %s20, 0
      %s23 = sadd.s32 %s22, 1
      %s24 = scalar_select %p21, %s22, %s23
      %p27 = pneg %p21
      %p28 = scmp.eq.s32.totalorder %s12, 1
      %p29 = por %p27, %p28
      %p30 = scmp.ne.s32.totalorder %s22, %s25
      %p31 = scmp.eq.s32.totalorder %s12, 0
      %p32 = por %p30, %p31
      %p33 = scmp.ne.s32.totalorder %s22, %s25
      %p34 = scmp.eq.s32.totalorder %s17, 1
      %p35 = por %p33, %p34
      %p36 = scmp.ne.s32.totalorder %s25, %s26
      %p37 = scmp.eq.s32.totalorder %s17, 0
      %p38 = por %p36, %p37
      %p39 = scmp.ne.s32.totalorder %s25, %s26
      %p40 = scmp.eq.s32.totalorder %s18, 1
      %p41 = por %p39, %p40
      %p43 = scmp.ne.s32.totalorder %s26, %s42
      %p44 = scmp.eq.s32.totalorder %s18, 0
      %p45 = por %p43, %p44
      %s47 = sadd.s32 %s46, 1
      %p50 = scmp.eq.s32.totalorder %s12, 1
      %p51 = scmp.ne.s32.totalorder %s46, %s48
      %p52 = scmp.eq.s32.totalorder %s12, 0
      %p53 = por %p51, %p52
      %p54 = scmp.ne.s32.totalorder %s46, %s48
      %p55 = scmp.eq.s32.totalorder %s17, 1
      %p56 = por %p54, %p55
      %p57 = scmp.ne.s32.totalorder %s48, %s49
      %p58 = scmp.eq.s32.totalorder %s17, 0
      %p59 = por %p57, %p58
      %p60 = scmp.ne.s32.totalorder %s48, %s49
      %p61 = scmp.eq.s32.totalorder %s18, 1
      %p62 = por %p60, %p61
      %p64 = scmp.ne.s32.totalorder %s49, %s63
      %p65 = scmp.eq.s32.totalorder %s18, 0
      %p66 = por %p64, %p65
      %s68 = sadd.s32 %s67, 1
      %p71 = scmp.eq.s32.totalorder %s12, 1
      %p72 = scmp.ne.s32.totalorder %s67, %s69
      %p73 = scmp.eq.s32.totalorder %s12, 0
      %p74 = por %p72, %p73
      %p75 = scmp.ne.s32.totalorder %s67, %s69
      %p76 = scmp.eq.s32.totalorder %s17, 1
      %p77 = por %p75, %p76
      %p78 = scmp.ne.s32.totalorder %s69, %s70
      %p79 = scmp.eq.s32.totalorder %s17, 0
      %p80 = por %p78, %p79
      %p81 = scmp.ne.s32.totalorder %s69, %s70
      %p82 = scmp.eq.s32.totalorder %s18, 1
      %p83 = por %p81, %p82
      %p85 = scmp.ne.s32.totalorder %s70, %s84
      %p86 = scmp.eq.s32.totalorder %s18, 0
      %p87 = por %p85, %p86
      %s88 = ssub.s32 %s12, %s19
      %p89 = scmp.eq.s32.totalorder %s88, 0
      %s91 = sadd.s32 %s90, 1
      %s92 = scalar_select %p89, %s90, %s91
      %p95 = pneg %p89
      %p96 = scmp.eq.s32.totalorder %s12, 1
      %p97 = por %p95, %p96
      %p98 = scmp.ne.s32.totalorder %s90, %s93
      %p99 = scmp.eq.s32.totalorder %s12, 0
      %p100 = por %p98, %p99
      %p101 = scmp.ne.s32.totalorder %s90, %s93
      %p102 = scmp.eq.s32.totalorder %s17, 1
      %p103 = por %p101, %p102
      %p104 = scmp.ne.s32.totalorder %s93, %s94
      %p105 = scmp.eq.s32.totalorder %s17, 0
      %p106 = por %p104, %p105
      %p107 = scmp.ne.s32.totalorder %s93, %s94
      %p108 = scmp.eq.s32.totalorder %s18, 1
      %p109 = por %p107, %p108
      %p111 = scmp.ne.s32.totalorder %s94, %s110
      %p112 = scmp.eq.s32.totalorder %s18, 0
      %p113 = por %p111, %p112
      %p114 = scmp.le.s32.totalorder 1, %s12
      %p115 = scmp.lt.s32.totalorder %s12, 3
      %p116 = pnand %p114, %p115
      %p117 = pneg %p116
      // Predicated region
      $region9: #{tpu_custom_call.1} parent=5 // pred_check
        _
      $region10: #{tpu_custom_call.1} parent=5 // pred_check_branch
        %119 = sbr.rel (%p116) target = $region12
      $region11: #{tpu_custom_call.1} parent=5 // pred_region
        %s120 = ssub.s32 %s12, 1
        // Predicated region
        $region13: #{tpu_custom_call.1} parent=11 // pred_check
          %p121 = pneg %p59
        $region14: #{tpu_custom_call.1} parent=11 // pred_check_branch
          %123 = sbr.rel (%p121) target = $region16
        $region15: #{tpu_custom_call.1} parent=11 // pred_region
          _
        $region16: #{tpu_custom_call.1} parent=11 // pred_fallthru
          _
        // Predicated region
        $region17: #{tpu_custom_call.1} parent=11 // pred_check
          %p124 = pneg %p80
        $region18: #{tpu_custom_call.1} parent=11 // pred_check_branch
          %126 = sbr.rel (%p124) target = $region20
        $region19: #{tpu_custom_call.1} parent=11 // pred_region
          _
        $region20: #{tpu_custom_call.1} parent=11 // pred_fallthru
          _
      $region12: #{tpu_custom_call.1} parent=5 // pred_fallthru
        _
      %p127 = scmp.lt.s32.totalorder %s12, 2
      // Predicated region
      $region21: #{tpu_custom_call.1} parent=5 // pred_check
        %p128 = pneg %p127
      $region22: #{tpu_custom_call.1} parent=5 // pred_check_branch
        %130 = sbr.rel (%p128) target = $region24
      $region23: #{tpu_custom_call.1} parent=5 // pred_region
        // Predicated region
        $region25: #{tpu_custom_call.1} parent=23 // pred_check
          %p131 = pneg %p32
        $region26: #{tpu_custom_call.1} parent=23 // pred_check_branch
          %133 = sbr.rel (%p131) target = $region28
        $region27: #{tpu_custom_call.1} parent=23 // pred_region
          %p134 = scmp.lt.s32.totalorder %s12, 1
          %s135 = scalar_select %p134, %s12, 1
          %s136 = smul.addr %s135, 4
          %s137 = scalar_lea.vmem %s0, %s136
        $region28: #{tpu_custom_call.1} parent=23 // pred_fallthru
          _
      $region24: #{tpu_custom_call.1} parent=5 // pred_fallthru
        _
      %p138 = scmp.le.s32.totalorder 1, %s12
      %p139 = scmp.lt.s32.totalorder %s12, 3
      %p140 = pnand %p138, %p139
      %p141 = pneg %p140
      // Predicated region
      $region29: #{tpu_custom_call.1} parent=5 // pred_check
        _
      $region30: #{tpu_custom_call.1} parent=5 // pred_check_branch
        %143 = sbr.rel (%p140) target = $region32
      $region31: #{tpu_custom_call.1} parent=5 // pred_region
        %s144 = ssub.s32 %s12, 1
        %p145 = scmp.lt.s32.totalorder %s17, 1
        %s146 = scalar_select %p145, %s17, 1
        %s147 = smul.addr %s146, 4
        %s148 = scalar_lea.vmem %s0, %s147
        %p149 = pneg %p38
        %p150 = pneg %p35
        %p151 = pneg %p59
        %p152 = pneg %p56
        %p153 = pneg %p80
        %p154 = pneg %p77
        %p155 = pneg %p106
        %p156 = pneg %p103
        %s157 = sand.u32 %s93, 1
        %s158 = scalar_lea.sflag [#allocation3], %s157
        %s159 = sand.u32 %s93, 1
        %s160 = smul.addr %s159, 4
        %s161 = scalar_lea.vmem [#allocation2], %s160
        %p162 = scmp.lt.s32.totalorder %s17, 1
        %s163 = scalar_select %p162, %s17, 1
        %s164 = smul.addr %s163, 4
        %s165 = scalar_lea.vmem %s0, %s164
        %v166 = vld [vmem:[%s165] sm:$0xf]
        %vm167 = vcmask 125952
        %v168 = vsel %vm167, %v166, 0.0
        %169 = vadd.xlane.f32.xlu0 %v168
        %v170 = vpop.xlane.xlu0 %169
        %v171 = vrot.slane %v170, 4
        %v172 = vadd.f32 %v170, %v171
        %v173 = vrot.slane %v172, 2
        %v174 = vadd.f32 %v172, %v173
        %v175 = vrot.slane %v174, 1
        %v176 = vadd.f32 %v174, %v175
        %s177 = vtos %v176
        %v178 = vmul.f32 %v166, %v166
        %v179 = vsel %vm167, %v178, 0.0
        %180 = vadd.xlane.f32.xlu0 %v179
        %v181 = vpop.xlane.xlu0 %180
        %v182 = vrot.slane %v181, 4
        %v183 = vadd.f32 %v181, %v182
        %v184 = vrot.slane %v183, 2
        %v185 = vadd.f32 %v183, %v184
        %v186 = vrot.slane %v185, 1
        %v187 = vadd.f32 %v185, %v186
        %s188 = vtos %v187
        %s189 = smul.f32 %s177, 0.015625
        %s190 = smul.f32 %s188, 0.015625
        %s191 = smul.f32 %s189, %s189
        %s192 = ssub.f32 %s190, %s191
        %s193 = sadd.f32 %s192, 1e-08
        %v194 = vstv %s193
        %v195 = vrsqrt.pop %v194
        %v196 = vmul.f32 %v195, %v194
        %v197 = vmul.f32 %v196, %v195
        %v198 = vmul.f32 0.5, %v197
        %v199 = vsub.f32 1.5, %v198
        %v200 = vmul.f32 %v195, %v199
        %vm201 = vweird.f32 %v194
        %vm202 = vweird.f32 %v195
        %vm203 = vmor %vm201, %vm202
        %v204 = vsel %vm203, %v195, %v200
        %s205 = vtos %v204
        %v206 = vld [vmem:[%s1] sm:$0xf]
        %v207 = vld [vmem:[%s2] sm:$0xf]
        %v208 = vstv %s205
        %v209 = vmul.f32 %v206, %v208
        %v210 = vstv %s189
        %v211 = vmul.f32 %v210, %v206
        %v212 = vmul.f32 %v211, %v208
        %v213 = vsub.f32 %v207, %v212
        %215 = vset.pattern.permute.xlu0 0
        %216 = vperm.xlu0 %215, %v209
        %v217 = vpop.permute.xlu0 %216
        %v219 = vmul.f32 %v166, %v217
        %221 = vset.pattern.permute.xlu0 0
        %222 = vperm.xlu0 %221, %v213
        %v223 = vpop.permute.xlu0 %222
        %v225 = vadd.f32 %v219, %v223
        %226 = vst.msk [vmem:[%s161] sm:$0xf] %vm167, %v225
        %s227 = sand.u32 %s93, 1
        %s228 = scalar_lea.sflag [#allocation3], %s227
        %s229 = sand.u32 %s93, 1
        %s230 = smul.addr %s229, 4
        %s231 = scalar_lea.vmem [#allocation2], %s230
        // Predicated region
        $region33: #{tpu_custom_call.1} parent=31 // pred_check
          %p232 = pneg %p103
        $region34: #{tpu_custom_call.1} parent=31 // pred_check_branch
          %234 = sbr.rel (%p232) target = $region36
        $region35: #{tpu_custom_call.1} parent=31 // pred_region
          %236 = vsyncadd %s228, 0
          %s237 = smul.addr %s17, 4
          %s238 = scalar_lea.hbm %s3, %s237
          %s240 = sshll.u32 %s231, 4
          %s241 = int_to_ptr.vmem [resolvable:$true] %s240
          %s242 = sshll.u32 %s238, 4
          %s243 = int_to_ptr.hbm [resolvable:$true] %s242
          %245 = dma.vmem_to_hbm [thread:$0]  %s241, 64, %s243, %s228
        $region36: #{tpu_custom_call.1} parent=31 // pred_fallthru
          _
      $region32: #{tpu_custom_call.1} parent=5 // pred_fallthru
        _
      %p246 = scmp.le.s32.totalorder 2, %s12
      // Predicated region
      $region37: #{tpu_custom_call.1} parent=5 // pred_check
        %p247 = pneg %p246
      $region38: #{tpu_custom_call.1} parent=5 // pred_check_branch
        %249 = sbr.rel (%p247) target = $region40
      $region39: #{tpu_custom_call.1} parent=5 // pred_region
        %s250 = ssub.s32 %s12, 2
        // Predicated region
        $region41: #{tpu_custom_call.1} parent=39 // pred_check
          %p251 = pneg %p109
        $region42: #{tpu_custom_call.1} parent=39 // pred_check_branch
          %253 = sbr.rel (%p251) target = $region44
        $region43: #{tpu_custom_call.1} parent=39 // pred_region
          %s254 = sand.u32 %s94, 1
          %s255 = scalar_lea.sflag [#allocation3], %s254
          %s256 = sand.u32 %s94, 1
          %s257 = smul.addr %s256, 4
          %s258 = scalar_lea.vmem [#allocation2], %s257
          %260 = dma.done %s255, 64
        $region44: #{tpu_custom_call.1} parent=39 // pred_fallthru
          _
      $region40: #{tpu_custom_call.1} parent=5 // pred_fallthru
        _
    $region6: #{tpu_custom_call.1} parent=1 // loop_footer
      %s16 = sadd.s32 1, %s12
    $region7: #{tpu_custom_call.1} parent=1 // loop_footer_branch
      %11 = sbr.rel target = $region3
    $region8: #{tpu_custom_call.1} parent=1 // loop_exit
      _
    %261 = vsyncpa [#allocation3], 1
    %s262 = scalar_lea.sflag [#allocation3], 1
    %263 = vsyncpa %s262, 1

</llo_original>
